<compile_context>
chip_gen: v6e
topology: v6e:2x2x1
jax: 0.10.0
libtpu: 0.0.40
codegen_flags: <defaults>
</compile_context>

<pallas_src>
import functools

import numpy as np

import jax
import jax.numpy as jnp
from jax.experimental import pallas as pl
from jax.experimental.pallas import tpu as pltpu


TILE_ROWS = 2048                  # packed rows per tile (P points per row)
_VMEM_LIMIT = 32 * 1024 * 1024    # explicit scoped-VMEM budget (safe v5e..v7x)
_BN_EPS = 1e-5                    # nn.BatchNorm2d default


def _round_up(x, m):
    return (x + m - 1) // m * m


def _cdiv(a, b):
    return (a + b - 1) // b


# ---------------------------------------------------------------------------
# Plain-JAX glue: batched F.grid_sample(x, [px, py], align_corners=False,
# padding_mode='border') -> [N, C].  One fused XLA gather per tap, indexing
# NCHW directly (no transpose materialization of the full feature map).
# ---------------------------------------------------------------------------
def grid_sample_border(x, px, py, batch_id):
    """x: [B, C, H, W]; px, py: [N] in [-1, 1]; batch_id: [N] int32."""
    B, C, H, W = x.shape
    ix = jnp.clip(((px + 1.0) * W - 1.0) * 0.5, 0.0, float(W - 1))
    iy = jnp.clip(((py + 1.0) * H - 1.0) * 0.5, 0.0, float(H - 1))
    x0 = jnp.floor(ix)
    y0 = jnp.floor(iy)
    wx = (ix - x0)[:, None]
    wy = (iy - y0)[:, None]
    x0i = x0.astype(jnp.int32)
    y0i = y0.astype(jnp.int32)
    x1i = jnp.minimum(x0i + 1, W - 1)
    y1i = jnp.minimum(y0i + 1, H - 1)

    # TODO(synk): optionally fuse this 4-tap data-dependent gather into a
    # Pallas kernel (scalar-prefetched indices) writing packed bf16 feats.
    def tap(yi, xi):
        return x[batch_id, :, yi, xi]                      # [N, C]

    v00 = tap(y0i, x0i)
    v01 = tap(y0i, x1i)
    v10 = tap(y1i, x0i)
    v11 = tap(y1i, x1i)
    return (v00 * (1.0 - wx) * (1.0 - wy) + v01 * wx * (1.0 - wy)
            + v10 * (1.0 - wx) * wy + v11 * wx * wy)       # [N, C] f32


# ---------------------------------------------------------------------------
# Pass 1: per-lane sums of z = feats_packed @ W_lin_blockdiag (no bias, no
# mask -- zero-padded rows/slots contribute exactly zero).
# ---------------------------------------------------------------------------
def _bn_stats_kernel(feats_ref,                # VMEM [TN, lane_in] bf16
                     w_lin_ref,                # VMEM [lane_in, lane_out] bf16
                     sum_ref, sq_ref):         # VMEM [1, lane_out] f32 (resident)
    @pl.when(pl.program_id(0) == 0)
    def _():
        sum_ref[...] = jnp.zeros_like(sum_ref)
        sq_ref[...] = jnp.zeros_like(sq_ref)

    z = jnp.dot(feats_ref[...], w_lin_ref[...],
                preferred_element_type=jnp.float32)
    sum_ref[...] += jnp.sum(z, axis=0, keepdims=True)
    sq_ref[...] += jnp.sum(z * z, axis=0, keepdims=True)


def _bn_stats_pallas(feats, w_lin, tn):
    npad, lane_in = feats.shape
    lane_out = w_lin.shape[1]
    return pl.pallas_call(
        _bn_stats_kernel,
        out_shape=(jax.ShapeDtypeStruct((1, lane_out), jnp.float32),
                   jax.ShapeDtypeStruct((1, lane_out), jnp.float32)),
        grid_spec=pltpu.PrefetchScalarGridSpec(
            num_scalar_prefetch=0,
            grid=(npad // tn,),
            in_specs=[
                pl.BlockSpec((tn, lane_in), lambda i: (i, 0)),
                pl.BlockSpec((lane_in, lane_out), lambda i: (0, 0)),
            ],
            out_specs=(
                pl.BlockSpec((1, lane_out), lambda i: (0, 0)),
                pl.BlockSpec((1, lane_out), lambda i: (0, 0)),
            ),
        ),
        compiler_params=pltpu.CompilerParams(
            dimension_semantics=("arbitrary",),    # reduction / resident acc
            vmem_limit_bytes=_VMEM_LIMIT),
    )(feats, w_lin)


# ---------------------------------------------------------------------------
# Pass 2 (row-parallel): Linear -> folded BN scale/shift (incl. Linear bias)
# -> ReLU -> 1x1 head, bf16 output.
# ---------------------------------------------------------------------------
def _kp_head_kernel(feats_ref,                 # VMEM [TN, lane_in] bf16
                    w_lin_ref,                 # VMEM [lane_in, lane_out] bf16
                    scale_ref, shift_ref,      # VMEM [1, lane_out] f32
                    w_head_ref, b_head_ref,    # VMEM [lane_out, lane_k] bf16, [1, lane_k] f32
                    out_ref):                  # VMEM [TN, lane_k] bf16
    z = jnp.dot(feats_ref[...], w_lin_ref[...],
                preferred_element_type=jnp.float32)
    y = jnp.maximum(z * scale_ref[...] + shift_ref[...], 0.0)
    o = jnp.dot(y.astype(w_head_ref.dtype), w_head_ref[...],
                preferred_element_type=jnp.float32) + b_head_ref[...]
    out_ref[...] = o.astype(out_ref.dtype)


def _kp_head_pallas(feats, w_lin, scale, shift, w_head, b_head, tn):
    npad, lane_in = feats.shape
    lane_out = w_lin.shape[1]
    lane_k = w_head.shape[1]
    return pl.pallas_call(
        _kp_head_kernel,
        out_shape=jax.ShapeDtypeStruct((npad, lane_k), jnp.bfloat16),
        grid_spec=pltpu.PrefetchScalarGridSpec(
            num_scalar_prefetch=0,
            grid=(npad // tn,),
            in_specs=[
                pl.BlockSpec((tn, lane_in), lambda i: (i, 0)),
                pl.BlockSpec((lane_in, lane_out), lambda i: (0, 0)),
                pl.BlockSpec((1, lane_out), lambda i: (0, 0)),
                pl.BlockSpec((1, lane_out), lambda i: (0, 0)),
                pl.BlockSpec((lane_out, lane_k), lambda i: (0, 0)),
                pl.BlockSpec((1, lane_k), lambda i: (0, 0)),
            ],
            out_specs=pl.BlockSpec((tn, lane_k), lambda i: (i, 0)),
        ),
        compiler_params=pltpu.CompilerParams(
            dimension_semantics=("parallel",),     # shards across v7x's 2 TCs
            vmem_limit_bytes=_VMEM_LIMIT),
    )(feats, w_lin, scale, shift, w_head, b_head)


# ---------------------------------------------------------------------------
# Module wrapper
# ---------------------------------------------------------------------------
def init_params(key, in_channels, out_channels, num_classes):
    k = jax.random.split(key, 6)
    return dict(
        # nn.Linear(in, out): stored pre-transposed as [in, out]
        w_lin=0.1 * jax.random.normal(k[0], (in_channels, out_channels), jnp.float32),
        b_lin=0.1 * jax.random.normal(k[1], (1, out_channels), jnp.float32),
        # BatchNorm2d affine params
        gamma=1.0 + 0.1 * jax.random.normal(k[2], (1, out_channels), jnp.float32),
        beta=0.1 * jax.random.normal(k[3], (1, out_channels), jnp.float32),
        # head Conv2d(out_channels, num_classes, 1): stored as [out, classes]
        w_head=0.1 * jax.random.normal(k[4], (out_channels, num_classes), jnp.float32),
        b_head=0.1 * jax.random.normal(k[5], (1, num_classes), jnp.float32),
    )


@functools.partial(jax.jit, static_argnames=("num_points",))
def kp_classifier_forward(params, x, px, py, pxyz, pknn, num_points):
    """x: [B, Cin, H, W] (NCHW); px, py: [N]; num_points: static tuple of ints.

    Returns [N, num_classes, 1, 1] f32, matching the PyTorch module output.
    BatchNorm uses training-mode (biased) batch statistics, as for a freshly
    constructed module's forward pass."""
    del pxyz, pknn  # unused on the dummy=True path (see TODO at top of file)
    B = x.shape[0]
    num_points = tuple(int(n) for n in num_points)
    assert len(num_points) == B
    n_total = sum(num_points)
    assert n_total == px.shape[0] == py.shape[0]
    assert n_total > 0

    batch_id = jnp.asarray(np.repeat(np.arange(B, dtype=np.int32),
                                     np.asarray(num_points)))
    feats = grid_sample_border(x, px, py, batch_id)          # [N, Cin] f32

    cin = feats.shape[1]
    cout = params["w_lin"].shape[1]
    k = params["w_head"].shape[1]

    # --- point packing: P points per 128-lane row, slot lanes per point ----
    cmax = max(cin, cout, k)
    if cmax <= 128:
        P = 1
        while P * 2 * cmax <= 128:
            P *= 2
        slot_in = slot_out = slot_k = 128 // P
    else:                                  # generic fallback: plain 128-padding
        P = 1
        slot_in = _round_up(cin, 128)
        slot_out = _round_up(cout, 128)
        slot_k = _round_up(k, 128)
    lane_in, lane_out, lane_k = P * slot_in, P * slot_out, P * slot_k

    # --- row tiling over packed rows; aim for >=2 grid steps (megacore) ----
    n_rows = _cdiv(n_total, P)
    tn = min(TILE_ROWS, max(16, _round_up(_cdiv(n_rows, 2), 16)))
    npad = _round_up(n_rows, tn)

    # packed bf16 feats: [N, Cin] -> [npad, P*slot_in]
    feats_p = jnp.pad(feats, ((0, npad * P - n_total), (0, slot_in - cin)))
    feats_p = feats_p.astype(jnp.bfloat16).reshape(npad, lane_in)

    def block_diag(w, si, so):
        wpad = jnp.pad(w, ((0, si - w.shape[0]), (0, so - w.shape[1])))
        if P == 1:
            return wpad
        return jnp.kron(jnp.eye(P, dtype=w.dtype), wpad)

    w_lin_p = block_diag(params["w_lin"], slot_in, slot_out).astype(jnp.bfloat16)
    w_head_p = block_diag(params["w_head"], slot_out, slot_k).astype(jnp.bfloat16)

    # --- Pass 1: batch statistics of h = feats @ W_lin + b_lin -------------
    s, sq = _bn_stats_pallas(feats_p, w_lin_p, tn)           # [1, lane_out] each
    sum_z = s.reshape(P, slot_out).sum(axis=0)               # fold P point slots
    sum_z2 = sq.reshape(P, slot_out).sum(axis=0)

    b_lin = jnp.pad(params["b_lin"][0], (0, slot_out - cout))
    nf = jnp.float32(n_total)
    sum_h = sum_z + nf * b_lin                                # analytic bias shift
    sum_h2 = sum_z2 + 2.0 * b_lin * sum_z + nf * b_lin * b_lin
    mean = sum_h / nf
    var = jnp.maximum(sum_h2 / nf - mean * mean, 0.0)         # biased batch var
    inv_std = jax.lax.rsqrt(var + _BN_EPS)

    gamma = jnp.pad(params["gamma"][0], (0, slot_out - cout))
    beta = jnp.pad(params["beta"][0], (0, slot_out - cout))
    scale = gamma * inv_std
    shift = beta + (b_lin - mean) * scale                     # Linear bias folded in
    scale_p = jnp.tile(scale[None, :], (1, P))                # [1, lane_out]
    shift_p = jnp.tile(shift[None, :], (1, P))
    b_head_p = jnp.tile(jnp.pad(params["b_head"][0], (0, slot_k - k))[None, :],
                        (1, P))                               # [1, lane_k]

    # --- Pass 2: row-parallel fused Linear -> BN -> ReLU -> head -----------
    out_p = _kp_head_pallas(feats_p, w_lin_p, scale_p, shift_p,
                            w_head_p, b_head_p, tn)           # [npad, lane_k] bf16
    out = out_p.reshape(npad * P, slot_k)[:n_total, :k].astype(jnp.float32)
    return out.reshape(n_total, k, 1, 1)


# ---------------------------------------------------------------------------
if __name__ == "__main__":
    key = jax.random.PRNGKey(0)
    B, Cin, H, W = 2, 32, 16, 16
    Cout, num_classes = 32, 17
    num_points = (9, 11)
    N = sum(num_points)

    ks = jax.random.split(key, 8)
    x = jax.random.normal(ks[0], (B, Cin, H, W), jnp.float32)
    px = jax.random.uniform(ks[1], (N,), jnp.float32, minval=-1.0, maxval=1.0)
    py = jax.random.uniform(ks[2], (N,), jnp.float32, minval=-1.0, maxval=1.0)
    pxyz = jax.random.normal(ks[3], (N, 3), jnp.float32)
    pknn = jax.random.randint(ks[4], (N, 8), 0, N)
    params = init_params(ks[5], Cin, Cout, num_classes)

    out = kp_classifier_forward(params, x, px, py, pxyz, pknn, num_points)
    out = jax.block_until_ready(out)
    assert out.shape == (N, num_classes, 1, 1), out.shape
    assert bool(jnp.all(jnp.isfinite(out)))
    print("KERNEL_OK")
</pallas_src>

<mosaic_0001>
module attributes {stable_mosaic.version = 11 : i64} {
  func.func @_bn_stats_kernel(%arg0: i32, %arg1: memref<16x128xbf16, #tpu.memory_space<vmem>>, %arg2: memref<128x128xbf16, #tpu.memory_space<vmem>>, %arg3: memref<1x128xf32, #tpu.memory_space<vmem>>, %arg4: memref<1x128xf32, #tpu.memory_space<vmem>>) attributes {dimension_semantics = [#tpu.dimension_semantics<arbitrary>], iteration_bounds = array<i64: 1>, scalar_prefetch = 0 : i64, scratch_operands = 0 : i64, tpu.core_type = #tpu.core_type<tc>, window_params = [{transform_indices = @transform_0, window_bounds = array<i64: 16, 128>}, {pipeline_mode = #tpu.pipeline_mode<synchronous>, transform_indices = @transform_1, window_bounds = array<i64: 128, 128>}, {pipeline_mode = #tpu.pipeline_mode<synchronous>, transform_indices = @transform_2, window_bounds = array<i64: 1, 128>}, {pipeline_mode = #tpu.pipeline_mode<synchronous>, transform_indices = @transform_3, window_bounds = array<i64: 1, 128>}]} {
    %c0_i32 = arith.constant 0 : i32
    %0 = arith.cmpi eq, %arg0, %c0_i32 : i32
    %1 = arith.extui %0 : i1 to i32
    %c0_i32_0 = arith.constant 0 : i32
    %2 = arith.cmpi ne, %1, %c0_i32_0 : i32
    scf.if %2 {
      %cst_14 = arith.constant 0.000000e+00 : f32
      %17 = vector.broadcast %cst_14 : f32 to vector<1x128xf32>
      %c0_15 = arith.constant 0 : index
      %c0_16 = arith.constant 0 : index
      %18 = vector.load %arg3[%c0_15, %c0_16] : memref<1x128xf32, #tpu.memory_space<vmem>>, vector<1x128xf32>
      tpu.vector_store %arg3[%c0_15, %c0_16], %17 {strides = array<i32>} : memref<1x128xf32, #tpu.memory_space<vmem>>, vector<1x128xf32>,
      %cst_17 = arith.constant 0.000000e+00 : f32
      %19 = vector.broadcast %cst_17 : f32 to vector<1x128xf32>
      %c0_18 = arith.constant 0 : index
      %c0_19 = arith.constant 0 : index
      %20 = vector.load %arg4[%c0_18, %c0_19] : memref<1x128xf32, #tpu.memory_space<vmem>>, vector<1x128xf32>
      tpu.vector_store %arg4[%c0_18, %c0_19], %19 {strides = array<i32>} : memref<1x128xf32, #tpu.memory_space<vmem>>, vector<1x128xf32>,
    } else {
    }
    %c0 = arith.constant 0 : index
    %c0_1 = arith.constant 0 : index
    %3 = vector.load %arg1[%c0, %c0_1] : memref<16x128xbf16, #tpu.memory_space<vmem>>, vector<16x128xbf16>
    %c0_2 = arith.constant 0 : index
    %c0_3 = arith.constant 0 : index
    %4 = vector.load %arg2[%c0_2, %c0_3] : memref<128x128xbf16, #tpu.memory_space<vmem>>, vector<128x128xbf16>
    %cst = arith.constant dense<0.000000e+00> : vector<16x128xf32>
    %5 = tpu.matmul %3, %4, %cst {dimension_numbers = #tpu.dot_dimension_numbers<[1], [0], [0], [1], [0, 0, 1, 1], [], []>} : vector<16x128xbf16>, vector<128x128xbf16>, vector<16x128xf32> -> vector<16x128xf32>
    %c0_4 = arith.constant 0 : index
    %c0_5 = arith.constant 0 : index
    %6 = vector.load %arg3[%c0_4, %c0_5] : memref<1x128xf32, #tpu.memory_space<vmem>>, vector<1x128xf32>
    %cst_6 = arith.constant dense<0.000000e+00> : vector<128xf32>
    %7 = vector.multi_reduction <add>, %5, %cst_6 [0] : vector<16x128xf32> to vector<128xf32>
    %8 = vector.shape_cast %7 : vector<128xf32> to vector<1x128xf32>
    %9 = arith.addf %6, %8 : vector<1x128xf32>
    %c0_7 = arith.constant 0 : index
    %c0_8 = arith.constant 0 : index
    %10 = vector.load %arg3[%c0_7, %c0_8] : memref<1x128xf32, #tpu.memory_space<vmem>>, vector<1x128xf32>
    tpu.vector_store %arg3[%c0_7, %c0_8], %9 {strides = array<i32>} : memref<1x128xf32, #tpu.memory_space<vmem>>, vector<1x128xf32>,
    %c0_9 = arith.constant 0 : index
    %c0_10 = arith.constant 0 : index
    %11 = vector.load %arg4[%c0_9, %c0_10] : memref<1x128xf32, #tpu.memory_space<vmem>>, vector<1x128xf32>
    %12 = arith.mulf %5, %5 : vector<16x128xf32>
    %cst_11 = arith.constant dense<0.000000e+00> : vector<128xf32>
    %13 = vector.multi_reduction <add>, %12, %cst_11 [0] : vector<16x128xf32> to vector<128xf32>
    %14 = vector.shape_cast %13 : vector<128xf32> to vector<1x128xf32>
    %15 = arith.addf %11, %14 : vector<1x128xf32>
    %c0_12 = arith.constant 0 : index
    %c0_13 = arith.constant 0 : index
    %16 = vector.load %arg4[%c0_12, %c0_13] : memref<1x128xf32, #tpu.memory_space<vmem>>, vector<1x128xf32>
    tpu.vector_store %arg4[%c0_12, %c0_13], %15 {strides = array<i32>} : memref<1x128xf32, #tpu.memory_space<vmem>>, vector<1x128xf32>,
    return
  }
  func.func @transform_0(%arg0: i32) -> (i32, i32) {
    %c0_i32 = arith.constant 0 : i32
    %c0_i32_0 = arith.constant 0 : i32
    return %arg0, %c0_i32 : i32, i32
  }
  func.func @transform_1(%arg0: i32) -> (i32, i32) {
    %c0_i32 = arith.constant 0 : i32
    %c0_i32_0 = arith.constant 0 : i32
    %c0_i32_1 = arith.constant 0 : i32
    return %c0_i32, %c0_i32_0 : i32, i32
  }
  func.func @transform_2(%arg0: i32) -> (i32, i32) {
    %c0_i32 = arith.constant 0 : i32
    %c0_i32_0 = arith.constant 0 : i32
    %c0_i32_1 = arith.constant 0 : i32
    return %c0_i32, %c0_i32_0 : i32, i32
  }
  func.func @transform_3(%arg0: i32) -> (i32, i32) {
    %c0_i32 = arith.constant 0 : i32
    %c0_i32_0 = arith.constant 0 : i32
    %c0_i32_1 = arith.constant 0 : i32
    return %c0_i32, %c0_i32_0 : i32, i32
  }
}

module attributes {stable_mosaic.version = 11 : i64} {
  func.func @_kp_head_kernel(%arg0: i32, %arg1: memref<16x128xbf16, #tpu.memory_space<vmem>>, %arg2: memref<128x128xbf16, #tpu.memory_space<vmem>>, %arg3: memref<1x128xf32, #tpu.memory_space<vmem>>, %arg4: memref<1x128xf32, #tpu.memory_space<vmem>>, %arg5: memref<128x128xbf16, #tpu.memory_space<vmem>>, %arg6: memref<1x128xf32, #tpu.memory_space<vmem>>, %arg7: memref<16x128xbf16, #tpu.memory_space<vmem>>) attributes {dimension_semantics = [#tpu.dimension_semantics<parallel>], iteration_bounds = array<i64: 1>, scalar_prefetch = 0 : i64, scratch_operands = 0 : i64, tpu.core_type = #tpu.core_type<tc>, window_params = [{transform_indices = @transform_0, window_bounds = array<i64: 16, 128>}, {pipeline_mode = #tpu.pipeline_mode<synchronous>, transform_indices = @transform_1, window_bounds = array<i64: 128, 128>}, {pipeline_mode = #tpu.pipeline_mode<synchronous>, transform_indices = @transform_2, window_bounds = array<i64: 1, 128>}, {pipeline_mode = #tpu.pipeline_mode<synchronous>, transform_indices = @transform_3, window_bounds = array<i64: 1, 128>}, {pipeline_mode = #tpu.pipeline_mode<synchronous>, transform_indices = @transform_4, window_bounds = array<i64: 128, 128>}, {pipeline_mode = #tpu.pipeline_mode<synchronous>, transform_indices = @transform_5, window_bounds = array<i64: 1, 128>}, {transform_indices = @transform_6, window_bounds = array<i64: 16, 128>}]} {
    %c0 = arith.constant 0 : index
    %c0_0 = arith.constant 0 : index
    %0 = vector.load %arg1[%c0, %c0_0] : memref<16x128xbf16, #tpu.memory_space<vmem>>, vector<16x128xbf16>
    %c0_1 = arith.constant 0 : index
    %c0_2 = arith.constant 0 : index
    %1 = vector.load %arg2[%c0_1, %c0_2] : memref<128x128xbf16, #tpu.memory_space<vmem>>, vector<128x128xbf16>
    %cst = arith.constant dense<0.000000e+00> : vector<16x128xf32>
    %2 = tpu.matmul %0, %1, %cst {dimension_numbers = #tpu.dot_dimension_numbers<[1], [0], [0], [1], [0, 0, 1, 1], [], []>} : vector<16x128xbf16>, vector<128x128xbf16>, vector<16x128xf32> -> vector<16x128xf32>
    %c0_3 = arith.constant 0 : index
    %c0_4 = arith.constant 0 : index
    %3 = vector.load %arg3[%c0_3, %c0_4] : memref<1x128xf32, #tpu.memory_space<vmem>>, vector<1x128xf32>
    %4 = vector.broadcast %3 : vector<1x128xf32> to vector<16x128xf32>
    %5 = arith.mulf %2, %4 : vector<16x128xf32>
    %c0_5 = arith.constant 0 : index
    %c0_6 = arith.constant 0 : index
    %6 = vector.load %arg4[%c0_5, %c0_6] : memref<1x128xf32, #tpu.memory_space<vmem>>, vector<1x128xf32>
    %7 = vector.broadcast %6 : vector<1x128xf32> to vector<16x128xf32>
    %8 = arith.addf %5, %7 : vector<16x128xf32>
    %cst_7 = arith.constant 0.000000e+00 : f32
    %9 = vector.broadcast %cst_7 : f32 to vector<16x128xf32>
    %10 = arith.maximumf %8, %9 : vector<16x128xf32>
    %11 = arith.truncf %10 : vector<16x128xf32> to vector<16x128xbf16>
    %c0_8 = arith.constant 0 : index
    %c0_9 = arith.constant 0 : index
    %12 = vector.load %arg5[%c0_8, %c0_9] : memref<128x128xbf16, #tpu.memory_space<vmem>>, vector<128x128xbf16>
    %cst_10 = arith.constant dense<0.000000e+00> : vector<16x128xf32>
    %13 = tpu.matmul %11, %12, %cst_10 {dimension_numbers = #tpu.dot_dimension_numbers<[1], [0], [0], [1], [0, 0, 1, 1], [], []>} : vector<16x128xbf16>, vector<128x128xbf16>, vector<16x128xf32> -> vector<16x128xf32>
    %c0_11 = arith.constant 0 : index
    %c0_12 = arith.constant 0 : index
    %14 = vector.load %arg6[%c0_11, %c0_12] : memref<1x128xf32, #tpu.memory_space<vmem>>, vector<1x128xf32>
    %15 = vector.broadcast %14 : vector<1x128xf32> to vector<16x128xf32>
    %16 = arith.addf %13, %15 : vector<16x128xf32>
    %17 = arith.truncf %16 : vector<16x128xf32> to vector<16x128xbf16>
    %c0_13 = arith.constant 0 : index
    %c0_14 = arith.constant 0 : index
    %18 = vector.load %arg7[%c0_13, %c0_14] : memref<16x128xbf16, #tpu.memory_space<vmem>>, vector<16x128xbf16>
    tpu.vector_store %arg7[%c0_13, %c0_14], %17 {strides = array<i32>} : memref<16x128xbf16, #tpu.memory_space<vmem>>, vector<16x128xbf16>,
    return
  }
  func.func @transform_0(%arg0: i32) -> (i32, i32) {
    %c0_i32 = arith.constant 0 : i32
    %c0_i32_0 = arith.constant 0 : i32
    return %arg0, %c0_i32 : i32, i32
  }
  func.func @transform_1(%arg0: i32) -> (i32, i32) {
    %c0_i32 = arith.constant 0 : i32
    %c0_i32_0 = arith.constant 0 : i32
    %c0_i32_1 = arith.constant 0 : i32
    return %c0_i32, %c0_i32_0 : i32, i32
  }
  func.func @transform_2(%arg0: i32) -> (i32, i32) {
    %c0_i32 = arith.constant 0 : i32
    %c0_i32_0 = arith.constant 0 : i32
    %c0_i32_1 = arith.constant 0 : i32
    return %c0_i32, %c0_i32_0 : i32, i32
  }
  func.func @transform_3(%arg0: i32) -> (i32, i32) {
    %c0_i32 = arith.constant 0 : i32
    %c0_i32_0 = arith.constant 0 : i32
    %c0_i32_1 = arith.constant 0 : i32
    return %c0_i32, %c0_i32_0 : i32, i32
  }
  func.func @transform_4(%arg0: i32) -> (i32, i32) {
    %c0_i32 = arith.constant 0 : i32
    %c0_i32_0 = arith.constant 0 : i32
    %c0_i32_1 = arith.constant 0 : i32
    return %c0_i32, %c0_i32_0 : i32, i32
  }
  func.func @transform_5(%arg0: i32) -> (i32, i32) {
    %c0_i32 = arith.constant 0 : i32
    %c0_i32_0 = arith.constant 0 : i32
    %c0_i32_1 = arith.constant 0 : i32
    return %c0_i32, %c0_i32_0 : i32, i32
  }
  func.func @transform_6(%arg0: i32) -> (i32, i32) {
    %c0_i32 = arith.constant 0 : i32
    %c0_i32_0 = arith.constant 0 : i32
    return %arg0, %c0_i32 : i32, i32
  }
}

</mosaic_0001>

<llo_original>
// kernel: kp_classifier_forward.2
$region0: #{kp_classifier_forward.2}
  #allocation0 [shape = 'u32[]', space=smem, size = 0x4, offset = 0x4, fixed_abs, tag = 'smem constant byte address 0x4 - core index']
  #allocation1 [shape = 'u32[144,128]{1,0:T(1,128)}', space=vmem, size = 0x12000, scoped, tag = 'internal scratch']
  %s0 = inlined_call_operand.vmem [shape: bf16[16,128], index: 0, kind: input, shape index: {}]
  %s1 = inlined_call_operand.vmem [shape: bf16[128,128], index: 1, kind: input, shape index: {}]
  %s2 = inlined_call_operand.vmem [shape: f32[1,128], index: 2, kind: output, shape index: {0}]
  %s3 = inlined_call_operand.vmem [shape: f32[1,128], index: 3, kind: output, shape index: {1}]
  %4 = xla_tuple %s2, %s3
  %s5 = sld [smem:[#allocation0]]
  $region30: #{kp_classifier_forward.2} parent=0
    _
  %s7 = ssub.s32 1, %s5
  %s8 = scalar_select 0, %s7, %s5
  // Predicated region
  $region2: #{kp_classifier_forward.2} parent=0 // pred_check
    _
  $region3: #{kp_classifier_forward.2} parent=0 // pred_check_branch
    %10 = sbr.rel (0) target = $region5
  $region4: #{kp_classifier_forward.2} parent=0 // pred_region
    _
  $region5: #{kp_classifier_forward.2} parent=0 // pred_fallthru
    _
  // Predicated region
  $region6: #{kp_classifier_forward.2} parent=0 // pred_check
    _
  $region7: #{kp_classifier_forward.2} parent=0 // pred_check_branch
    %12 = sbr.rel (0) target = $region9
  $region8: #{kp_classifier_forward.2} parent=0 // pred_region
    _
  $region9: #{kp_classifier_forward.2} parent=0 // pred_fallthru
    _
  %p14 = scmp.eq.s32.totalorder 0, 0
  // Predicated region
  $region10: #{kp_classifier_forward.2} parent=0 // pred_check
    %p15 = pneg %p14
  $region11: #{kp_classifier_forward.2} parent=0 // pred_check_branch
    %17 = sbr.rel (%p15) target = $region13
  $region12: #{kp_classifier_forward.2} parent=0 // pred_region
    %18 = vst [vmem:[%s2] sm:$0x1] 0.0
    %19 = vst [vmem:[%s3] sm:$0x1] 0.0
  $region13: #{kp_classifier_forward.2} parent=0 // pred_fallthru
    _
  %v20 = vld [vmem:[%s0] sm:$0xf]
  %v21 = vld [vmem:[%s0 + $0x4] sm:$0xf]
  %v22 = vld [vmem:[%s1] sm:$0xf]
  %v23 = vld [vmem:[%s1 + $0x4] sm:$0xf]
  %v24 = vld [vmem:[%s1 + $0x8] sm:$0xf]
  %v25 = vld [vmem:[%s1 + $0xc] sm:$0xf]
  %v26 = vld [vmem:[%s1 + $0x10] sm:$0xf]
  %v27 = vld [vmem:[%s1 + $0x14] sm:$0xf]
  %v28 = vld [vmem:[%s1 + $0x18] sm:$0xf]
  %v29 = vld [vmem:[%s1 + $0x1c] sm:$0xf]
  %v30 = vld [vmem:[%s1 + $0x20] sm:$0xf]
  %v31 = vld [vmem:[%s1 + $0x24] sm:$0xf]
  %v32 = vld [vmem:[%s1 + $0x28] sm:$0xf]
  %v33 = vld [vmem:[%s1 + $0x2c] sm:$0xf]
  %v34 = vld [vmem:[%s1 + $0x30] sm:$0xf]
  %v35 = vld [vmem:[%s1 + $0x34] sm:$0xf]
  %v36 = vld [vmem:[%s1 + $0x38] sm:$0xf]
  %v37 = vld [vmem:[%s1 + $0x3c] sm:$0xf]
  %v40 = vunpack.c.l.b16 %v20
  %v41 = vunpack.c.l.b16 %v21
  %v42 = vpack.c.b16 %v41, %v40
  %v60 = vunpack.c.l.b16 %v22
  %v61 = vunpack.c.l.b16 %v23
  %v62 = vunpack.c.l.b16 %v24
  %v63 = vunpack.c.l.b16 %v25
  %v64 = vunpack.c.l.b16 %v26
  %v65 = vunpack.c.l.b16 %v27
  %v66 = vunpack.c.l.b16 %v28
  %v67 = vunpack.c.l.b16 %v29
  %v68 = vunpack.c.l.b16 %v30
  %v69 = vunpack.c.l.b16 %v31
  %v70 = vunpack.c.l.b16 %v32
  %v71 = vunpack.c.l.b16 %v33
  %v72 = vunpack.c.l.b16 %v34
  %v73 = vunpack.c.l.b16 %v35
  %v74 = vunpack.c.l.b16 %v36
  %v75 = vunpack.c.l.b16 %v37
  %v76 = vpack.c.b16 %v61, %v60
  %v77 = vpack.c.b16 %v63, %v62
  %v78 = vpack.c.b16 %v65, %v64
  %v79 = vpack.c.b16 %v67, %v66
  %v80 = vpack.c.b16 %v69, %v68
  %v81 = vpack.c.b16 %v71, %v70
  %v82 = vpack.c.b16 %v73, %v72
  %v83 = vpack.c.b16 %v75, %v74
  %92 = vmatprep.subr.bf16.mxu0 0
  %93 = vmatpush1.bf16.msra.mxu0 %v83
  %94 = vmatprep.subr.bf16.mxu0 0
  %95 = vmatpush1.bf16.msra.mxu0 %v82
  %96 = vmatprep.subr.bf16.mxu0 0
  %97 = vmatpush1.bf16.msra.mxu0 %v81
  %98 = vmatprep.subr.bf16.mxu0 0
  %99 = vmatpush1.bf16.msra.mxu0 %v80
  %100 = vmatprep.subr.bf16.mxu0 0
  %101 = vmatpush1.bf16.msra.mxu0 %v79
  %102 = vmatprep.subr.bf16.mxu0 0
  %103 = vmatpush1.bf16.msra.mxu0 %v78
  %104 = vmatprep.subr.bf16.mxu0 0
  %105 = vmatpush1.bf16.msra.mxu0 %v77
  %106 = vmatprep.subr.bf16.mxu0 0
  %107 = vmatpush1.bf16.msra.mxu0 %v76
  %108 = vmatprep.subr.bf16.mxu0 0
  %109 = vmatpush2.bf16.msra.mxu0 0
  %110 = vmatprep.subr.bf16.mxu0 0
  %111 = vmatpush2.bf16.msra.mxu0 0
  %112 = vmatprep.subr.bf16.mxu0 0
  %113 = vmatpush2.bf16.msra.mxu0 0
  %114 = vmatprep.subr.bf16.mxu0 0
  %115 = vmatpush2.bf16.msra.mxu0 0
  %116 = vmatprep.subr.bf16.mxu0 0
  %117 = vmatpush2.bf16.msra.mxu0 0
  %118 = vmatprep.subr.bf16.mxu0 0
  %119 = vmatpush2.bf16.msra.mxu0 0
  %120 = vmatprep.subr.bf16.mxu0 0
  %121 = vmatpush2.bf16.msra.mxu0 0
  %122 = vmatprep.subr.bf16.mxu0 0
  %123 = vmatpush2.bf16.msra.mxu0 0
  %124 = vmatprep.mubr.bf16.mxu0 0
  %125 = vmatmul.mubr.bf16.gmra.mxu0 %v42
  %v126 = vpop.f32.mrf.mxu0
  %v127 = vadd.f32 0.0, %v126
  %v128 = vpop.f32.mrf.mxu0
  %v129 = vpop.f32.mrf.mxu0
  %v130 = vadd.f32 0.0, %v129
  %v131 = vpop.f32.mrf.mxu0
  %132 = vdwg.mxu0
  %v133 = vld [vmem:[%s2] sm:$0x1]
  %v134 = vadd.f32 %v127, %v130
  %v135 = vrot.slane %v134, 4
  %v136 = vadd.f32 %v134, %v135
  %v137 = vrot.slane %v136, 2
  %v138 = vadd.f32 %v136, %v137
  %v139 = vrot.slane %v138, 1
  %v140 = vadd.f32 %v138, %v139
  %v141 = vadd.f32 %v133, %v140
  %142 = vst [vmem:[%s2] sm:$0x1] %v141
  %v143 = vld [vmem:[%s3] sm:$0x1]
  %v144 = vmul.f32 %v127, %v127
  %v145 = vmul.f32 %v130, %v130
  %v146 = vadd.f32 %v144, %v145
  %v147 = vrot.slane %v146, 4
  %v148 = vadd.f32 %v146, %v147
  %v149 = vrot.slane %v148, 2
  %v150 = vadd.f32 %v148, %v149
  %v151 = vrot.slane %v150, 1
  %v152 = vadd.f32 %v150, %v151
  %v153 = vadd.f32 %v143, %v152
  %154 = vst [vmem:[%s3] sm:$0x1] %v153
  // Predicated region
  $region14: #{kp_classifier_forward.2} parent=0 // pred_check
    _
  $region15: #{kp_classifier_forward.2} parent=0 // pred_check_branch
    %156 = sbr.rel (0) target = $region17
  $region16: #{kp_classifier_forward.2} parent=0 // pred_region
    _
  $region17: #{kp_classifier_forward.2} parent=0 // pred_fallthru
    _
  // Predicated region
  $region18: #{kp_classifier_forward.2} parent=0 // pred_check
    _
  $region19: #{kp_classifier_forward.2} parent=0 // pred_check_branch
    %158 = sbr.rel (0) target = $region21
  $region20: #{kp_classifier_forward.2} parent=0 // pred_region
    _
  $region21: #{kp_classifier_forward.2} parent=0 // pred_fallthru
    _
  // Predicated region
  $region22: #{kp_classifier_forward.2} parent=0 // pred_check
    _
  $region23: #{kp_classifier_forward.2} parent=0 // pred_check_branch
    %160 = sbr.rel (0) target = $region25
  $region24: #{kp_classifier_forward.2} parent=0 // pred_region
    _
  $region25: #{kp_classifier_forward.2} parent=0 // pred_fallthru
    _
  // Predicated region
  $region26: #{kp_classifier_forward.2} parent=0 // pred_check
    _
  $region27: #{kp_classifier_forward.2} parent=0 // pred_check_branch
    %162 = sbr.rel (0) target = $region29
  $region28: #{kp_classifier_forward.2} parent=0 // pred_region
    _
  $region29: #{kp_classifier_forward.2} parent=0 // pred_fallthru
    _

// kernel: kp_classifier_forward.3
$region0: #{kp_classifier_forward.3}
  #allocation0 [shape = 'u32[]', space=smem, size = 0x4, offset = 0x4, fixed_abs, tag = 'smem constant byte address 0x4 - core index']
  #allocation1 [shape = 'u32[144,128]{1,0:T(1,128)}', space=vmem, size = 0x12000, scoped, tag = 'internal scratch']
  %s0 = inlined_call_operand.vmem [shape: bf16[16,128], index: 0, kind: input, shape index: {}]
  %s1 = inlined_call_operand.vmem [shape: bf16[128,128], index: 1, kind: input, shape index: {}]
  %s2 = inlined_call_operand.vmem [shape: f32[1,128], index: 2, kind: input, shape index: {}]
  %s3 = inlined_call_operand.vmem [shape: f32[1,128], index: 3, kind: input, shape index: {}]
  %s4 = inlined_call_operand.vmem [shape: bf16[128,128], index: 4, kind: input, shape index: {}]
  %s5 = inlined_call_operand.vmem [shape: f32[1,128], index: 5, kind: input, shape index: {}]
  %s6 = inlined_call_operand.vmem [shape: bf16[16,128], index: 6, kind: output, shape index: {}]
  %s7 = sld [smem:[#allocation0]]
  $region34: #{kp_classifier_forward.3} parent=0
    _
  %s9 = ssub.s32 1, %s7
  %s10 = scalar_select 0, %s9, %s7
  // Predicated region
  $region2: #{kp_classifier_forward.3} parent=0 // pred_check
    _
  $region3: #{kp_classifier_forward.3} parent=0 // pred_check_branch
    %12 = sbr.rel (0) target = $region5
  $region4: #{kp_classifier_forward.3} parent=0 // pred_region
    _
  $region5: #{kp_classifier_forward.3} parent=0 // pred_fallthru
    _
  // Predicated region
  $region6: #{kp_classifier_forward.3} parent=0 // pred_check
    _
  $region7: #{kp_classifier_forward.3} parent=0 // pred_check_branch
    %14 = sbr.rel (0) target = $region9
  $region8: #{kp_classifier_forward.3} parent=0 // pred_region
    _
  $region9: #{kp_classifier_forward.3} parent=0 // pred_fallthru
    _
  // Predicated region
  $region10: #{kp_classifier_forward.3} parent=0 // pred_check
    _
  $region11: #{kp_classifier_forward.3} parent=0 // pred_check_branch
    %16 = sbr.rel (0) target = $region13
  $region12: #{kp_classifier_forward.3} parent=0 // pred_region
    _
  $region13: #{kp_classifier_forward.3} parent=0 // pred_fallthru
    _
  // Predicated region
  $region14: #{kp_classifier_forward.3} parent=0 // pred_check
    _
  $region15: #{kp_classifier_forward.3} parent=0 // pred_check_branch
    %18 = sbr.rel (0) target = $region17
  $region16: #{kp_classifier_forward.3} parent=0 // pred_region
    _
  $region17: #{kp_classifier_forward.3} parent=0 // pred_fallthru
    _
  // Predicated region
  $region18: #{kp_classifier_forward.3} parent=0 // pred_check
    _
  $region19: #{kp_classifier_forward.3} parent=0 // pred_check_branch
    %20 = sbr.rel (0) target = $region21
  $region20: #{kp_classifier_forward.3} parent=0 // pred_region
    _
  $region21: #{kp_classifier_forward.3} parent=0 // pred_fallthru
    _
  // Predicated region
  $region22: #{kp_classifier_forward.3} parent=0 // pred_check
    _
  $region23: #{kp_classifier_forward.3} parent=0 // pred_check_branch
    %22 = sbr.rel (0) target = $region25
  $region24: #{kp_classifier_forward.3} parent=0 // pred_region
    _
  $region25: #{kp_classifier_forward.3} parent=0 // pred_fallthru
    _
  %v24 = vld [vmem:[%s0] sm:$0xf]
  %v25 = vld [vmem:[%s0 + $0x4] sm:$0xf]
  %v26 = vld [vmem:[%s1] sm:$0xf]
  %v27 = vld [vmem:[%s1 + $0x4] sm:$0xf]
  %v28 = vld [vmem:[%s1 + $0x8] sm:$0xf]
  %v29 = vld [vmem:[%s1 + $0xc] sm:$0xf]
  %v30 = vld [vmem:[%s1 + $0x10] sm:$0xf]
  %v31 = vld [vmem:[%s1 + $0x14] sm:$0xf]
  %v32 = vld [vmem:[%s1 + $0x18] sm:$0xf]
  %v33 = vld [vmem:[%s1 + $0x1c] sm:$0xf]
  %v34 = vld [vmem:[%s1 + $0x20] sm:$0xf]
  %v35 = vld [vmem:[%s1 + $0x24] sm:$0xf]
  %v36 = vld [vmem:[%s1 + $0x28] sm:$0xf]
  %v37 = vld [vmem:[%s1 + $0x2c] sm:$0xf]
  %v38 = vld [vmem:[%s1 + $0x30] sm:$0xf]
  %v39 = vld [vmem:[%s1 + $0x34] sm:$0xf]
  %v40 = vld [vmem:[%s1 + $0x38] sm:$0xf]
  %v41 = vld [vmem:[%s1 + $0x3c] sm:$0xf]
  %v44 = vunpack.c.l.b16 %v24
  %v45 = vunpack.c.l.b16 %v25
  %v46 = vpack.c.b16 %v45, %v44
  %v64 = vunpack.c.l.b16 %v26
  %v65 = vunpack.c.l.b16 %v27
  %v66 = vunpack.c.l.b16 %v28
  %v67 = vunpack.c.l.b16 %v29
  %v68 = vunpack.c.l.b16 %v30
  %v69 = vunpack.c.l.b16 %v31
  %v70 = vunpack.c.l.b16 %v32
  %v71 = vunpack.c.l.b16 %v33
  %v72 = vunpack.c.l.b16 %v34
  %v73 = vunpack.c.l.b16 %v35
  %v74 = vunpack.c.l.b16 %v36
  %v75 = vunpack.c.l.b16 %v37
  %v76 = vunpack.c.l.b16 %v38
  %v77 = vunpack.c.l.b16 %v39
  %v78 = vunpack.c.l.b16 %v40
  %v79 = vunpack.c.l.b16 %v41
  %v80 = vpack.c.b16 %v65, %v64
  %v81 = vpack.c.b16 %v67, %v66
  %v82 = vpack.c.b16 %v69, %v68
  %v83 = vpack.c.b16 %v71, %v70
  %v84 = vpack.c.b16 %v73, %v72
  %v85 = vpack.c.b16 %v75, %v74
  %v86 = vpack.c.b16 %v77, %v76
  %v87 = vpack.c.b16 %v79, %v78
  %96 = vmatprep.subr.bf16.mxu0 0
  %97 = vmatpush1.bf16.msra.mxu0 %v87
  %98 = vmatprep.subr.bf16.mxu0 0
  %99 = vmatpush1.bf16.msra.mxu0 %v86
  %100 = vmatprep.subr.bf16.mxu0 0
  %101 = vmatpush1.bf16.msra.mxu0 %v85
  %102 = vmatprep.subr.bf16.mxu0 0
  %103 = vmatpush1.bf16.msra.mxu0 %v84
  %104 = vmatprep.subr.bf16.mxu0 0
  %105 = vmatpush1.bf16.msra.mxu0 %v83
  %106 = vmatprep.subr.bf16.mxu0 0
  %107 = vmatpush1.bf16.msra.mxu0 %v82
  %108 = vmatprep.subr.bf16.mxu0 0
  %109 = vmatpush1.bf16.msra.mxu0 %v81
  %110 = vmatprep.subr.bf16.mxu0 0
  %111 = vmatpush1.bf16.msra.mxu0 %v80
  %112 = vmatprep.subr.bf16.mxu0 0
  %113 = vmatpush2.bf16.msra.mxu0 0
  %114 = vmatprep.subr.bf16.mxu0 0
  %115 = vmatpush2.bf16.msra.mxu0 0
  %116 = vmatprep.subr.bf16.mxu0 0
  %117 = vmatpush2.bf16.msra.mxu0 0
  %118 = vmatprep.subr.bf16.mxu0 0
  %119 = vmatpush2.bf16.msra.mxu0 0
  %120 = vmatprep.subr.bf16.mxu0 0
  %121 = vmatpush2.bf16.msra.mxu0 0
  %122 = vmatprep.subr.bf16.mxu0 0
  %123 = vmatpush2.bf16.msra.mxu0 0
  %124 = vmatprep.subr.bf16.mxu0 0
  %125 = vmatpush2.bf16.msra.mxu0 0
  %126 = vmatprep.subr.bf16.mxu0 0
  %127 = vmatpush2.bf16.msra.mxu0 0
  %128 = vmatprep.mubr.bf16.mxu0 0
  %129 = vmatmul.mubr.bf16.gmra.mxu0 %v46
  %v130 = vpop.f32.mrf.mxu0
  %v131 = vadd.f32 0.0, %v130
  %v132 = vpop.f32.mrf.mxu0
  %v133 = vpop.f32.mrf.mxu0
  %v134 = vadd.f32 0.0, %v133
  %v135 = vpop.f32.mrf.mxu0
  %136 = vdwg.mxu0
  %v137 = vld [vmem:[%s2] sm:$0x1]
  %v139 = vlaneseq
  %v140 = vshrl.u32 %v139, 7
  %v141 = vsub.s32 0, %v140
  %v142 = vrot.slane %v137, %v141
  %v144 = vmul.f32 %v131, %v142
  %v145 = vmul.f32 %v134, %v142
  %v146 = vld [vmem:[%s3] sm:$0x1]
  %v148 = vlaneseq
  %v149 = vshrl.u32 %v148, 7
  %v150 = vsub.s32 0, %v149
  %v151 = vrot.slane %v146, %v150
  %v153 = vadd.f32 %v144, %v151
  %v154 = vadd.f32 %v145, %v151
  %v155 = vmax.f32 %v153, 0.0
  %v156 = vmax.f32 %v154, 0.0
  %v157 = vpack.c.bf16 %v156, %v155
  %v158 = vld [vmem:[%s4] sm:$0xf]
  %v159 = vld [vmem:[%s4 + $0x4] sm:$0xf]
  %v160 = vld [vmem:[%s4 + $0x8] sm:$0xf]
  %v161 = vld [vmem:[%s4 + $0xc] sm:$0xf]
  %v162 = vld [vmem:[%s4 + $0x10] sm:$0xf]
  %v163 = vld [vmem:[%s4 + $0x14] sm:$0xf]
  %v164 = vld [vmem:[%s4 + $0x18] sm:$0xf]
  %v165 = vld [vmem:[%s4 + $0x1c] sm:$0xf]
  %v166 = vld [vmem:[%s4 + $0x20] sm:$0xf]
  %v167 = vld [vmem:[%s4 + $0x24] sm:$0xf]
  %v168 = vld [vmem:[%s4 + $0x28] sm:$0xf]
  %v169 = vld [vmem:[%s4 + $0x2c] sm:$0xf]
  %v170 = vld [vmem:[%s4 + $0x30] sm:$0xf]
  %v171 = vld [vmem:[%s4 + $0x34] sm:$0xf]
  %v172 = vld [vmem:[%s4 + $0x38] sm:$0xf]
  %v173 = vld [vmem:[%s4 + $0x3c] sm:$0xf]
  %v174 = vld [vmem:[%s5] sm:$0x1]
  %v176 = vlaneseq
  %v177 = vshrl.u32 %v176, 7
  %v178 = vsub.s32 0, %v177
  %v179 = vrot.slane %v174, %v178
  %v197 = vunpack.c.l.b16 %v158
  %v198 = vunpack.c.l.b16 %v159
  %v199 = vunpack.c.l.b16 %v160
  %v200 = vunpack.c.l.b16 %v161
  %v201 = vunpack.c.l.b16 %v162
  %v202 = vunpack.c.l.b16 %v163
  %v203 = vunpack.c.l.b16 %v164
  %v204 = vunpack.c.l.b16 %v165
  %v205 = vunpack.c.l.b16 %v166
  %v206 = vunpack.c.l.b16 %v167
  %v207 = vunpack.c.l.b16 %v168
  %v208 = vunpack.c.l.b16 %v169
  %v209 = vunpack.c.l.b16 %v170
  %v210 = vunpack.c.l.b16 %v171
  %v211 = vunpack.c.l.b16 %v172
  %v212 = vunpack.c.l.b16 %v173
  %v213 = vpack.c.b16 %v198, %v197
  %v214 = vpack.c.b16 %v200, %v199
  %v215 = vpack.c.b16 %v202, %v201
  %v216 = vpack.c.b16 %v204, %v203
  %v217 = vpack.c.b16 %v206, %v205
  %v218 = vpack.c.b16 %v208, %v207
  %v219 = vpack.c.b16 %v210, %v209
  %v220 = vpack.c.b16 %v212, %v211
  %229 = vmatprep.subr.bf16.mxu0 0
  %230 = vmatpush1.bf16.msra.mxu0 %v220
  %231 = vmatprep.subr.bf16.mxu0 0
  %232 = vmatpush1.bf16.msra.mxu0 %v219
  %233 = vmatprep.subr.bf16.mxu0 0
  %234 = vmatpush1.bf16.msra.mxu0 %v218
  %235 = vmatprep.subr.bf16.mxu0 0
  %236 = vmatpush1.bf16.msra.mxu0 %v217
  %237 = vmatprep.subr.bf16.mxu0 0
  %238 = vmatpush1.bf16.msra.mxu0 %v216
  %239 = vmatprep.subr.bf16.mxu0 0
  %240 = vmatpush1.bf16.msra.mxu0 %v215
  %241 = vmatprep.subr.bf16.mxu0 0
  %242 = vmatpush1.bf16.msra.mxu0 %v214
  %243 = vmatprep.subr.bf16.mxu0 0
  %244 = vmatpush1.bf16.msra.mxu0 %v213
  %245 = vmatprep.subr.bf16.mxu0 0
  %246 = vmatpush2.bf16.msra.mxu0 0
  %247 = vmatprep.subr.bf16.mxu0 0
  %248 = vmatpush2.bf16.msra.mxu0 0
  %249 = vmatprep.subr.bf16.mxu0 0
  %250 = vmatpush2.bf16.msra.mxu0 0
  %251 = vmatprep.subr.bf16.mxu0 0
  %252 = vmatpush2.bf16.msra.mxu0 0
  %253 = vmatprep.subr.bf16.mxu0 0
  %254 = vmatpush2.bf16.msra.mxu0 0
  %255 = vmatprep.subr.bf16.mxu0 0
  %256 = vmatpush2.bf16.msra.mxu0 0
  %257 = vmatprep.subr.bf16.mxu0 0
  %258 = vmatpush2.bf16.msra.mxu0 0
  %259 = vmatprep.subr.bf16.mxu0 0
  %260 = vmatpush2.bf16.msra.mxu0 0
  %261 = vmatprep.mubr.bf16.mxu0 0
  %262 = vmatmul.mubr.bf16.gmra.mxu0 %v157
  %v263 = vpop.f32.mrf.mxu0
  %v264 = vadd.f32 %v179, %v263
  %v265 = vpop.f32.mrf.mxu0
  %v266 = vpop.f32.mrf.mxu0
  %v267 = vadd.f32 %v179, %v266
  %v268 = vpop.f32.mrf.mxu0
  %269 = vdwg.mxu0
  %v270 = vpack.c.bf16 %v267, %v264
  %v272 = vunpack.c.l.b16 %v270
  %v273 = vunpack.c.h.b16 %v270
  %v274 = vpack.c.b16 %v272, %v272
  %v275 = vpack.c.b16 %v273, %v273
  %278 = vst [vmem:[%s6] sm:$0xf] %v274
  %279 = vst [vmem:[%s6 + $0x4] sm:$0xf] %v275
  // Predicated region
  $region26: #{kp_classifier_forward.3} parent=0 // pred_check
    _
  $region27: #{kp_classifier_forward.3} parent=0 // pred_check_branch
    %281 = sbr.rel (0) target = $region29
  $region28: #{kp_classifier_forward.3} parent=0 // pred_region
    _
  $region29: #{kp_classifier_forward.3} parent=0 // pred_fallthru
    _
  // Predicated region
  $region30: #{kp_classifier_forward.3} parent=0 // pred_check
    _
  $region31: #{kp_classifier_forward.3} parent=0 // pred_check_branch
    %283 = sbr.rel (0) target = $region33
  $region32: #{kp_classifier_forward.3} parent=0 // pred_region
    _
  $region33: #{kp_classifier_forward.3} parent=0 // pred_fallthru
    _

</llo_original>
